<compile_context>
chip_gen: v6e
topology: v6e:2x2x1
jax: 0.10.0
libtpu: 0.0.40
codegen_flags: <defaults>
</compile_context>

<pallas_src>
import functools

import jax
import jax.numpy as jnp
from jax import lax
from jax.experimental import pallas as pl
from jax.experimental.pallas import tpu as pltpu

_LANE = 128
_SUBLANE = 8


def _round_up(x, m):
    return (x + m - 1) // m * m


def _cdiv(a, b):
    return -(-a // b)


@functools.lru_cache(maxsize=1)
def _vmem_budgets():
    """Generation-aware (block_budget_bytes, vmem_limit_bytes)."""
    try:
        cap = int(pltpu.get_tpu_info().vmem_capacity_bytes)
    except Exception:
        cap = 64 * 1024 * 1024  # unknown part -> assume the smallest (v7x-class)
    if cap >= 100 * 1024 * 1024:
        # 128 MiB parts (v5e / v6e): large blocks, generous scoped limit.
        return 24 * 1024 * 1024, 100 * 1024 * 1024
    # 64 MiB parts (v7x): keep double-buffered in+out comfortably under 56 MiB.
    return 12 * 1024 * 1024, 56 * 1024 * 1024


def _pick_bt(B, bt_max):
    """Largest divisor of B that fits, preferring an even grid length B//bt."""
    bt_max = max(1, min(B, bt_max))
    best = 1
    for bt in range(1, bt_max + 1):
        if B % bt == 0:
            best = bt
    if B >= 2 and (B // best) % 2 == 1:
        for bt in range(bt_max, 0, -1):
            if B % bt == 0 and (B // bt) % 2 == 0:
                return bt
    return best


# --------------------------- fused single-pass path ---------------------------

def _make_fused_kernel(inv_hw, hw, ragged):
    def kernel(x_ref, w1t_ref, b1_ref, w2t_ref, b2_ref, o_ref):
        x = x_ref[...]                                               # (Bt, C, HW)
        if ragged:
            # Zero the (vreg-pad) lanes beyond HW before the lane reduction.
            pos = lax.broadcasted_iota(jnp.int32, x.shape, 2)
            x = jnp.where(pos < hw, x, jnp.zeros_like(x))
        pooled = jnp.sum(x, axis=-1, dtype=jnp.float32) * inv_hw     # (Bt, C)
        y1 = jnp.maximum(
            jnp.dot(pooled, w1t_ref[...], preferred_element_type=jnp.float32)
            + b1_ref[...], 0.0)                                      # (Bt, Cr)
        y2 = jax.nn.sigmoid(
            jnp.dot(y1, w2t_ref[...], preferred_element_type=jnp.float32)
            + b2_ref[...])                                           # (Bt, C)
        scale = y2.astype(o_ref.dtype)[:, :, None]                   # (Bt, C, 1)
        # Fresh read of x_ref for the multiply: don't keep the big tile's SSA
        # value live across the reduction (vld slots are free in an HBM-bound
        # kernel; spilling vregs is not).
        o_ref[...] = (x_ref[...] * scale).astype(o_ref.dtype)
    return kernel


def _ca_fused(x_flat, w1t, b1r, w2t, b2r, hw, bt, vmem_limit):
    B, C, HW = x_flat.shape
    Cr = w1t.shape[1]
    itemsize = x_flat.dtype.itemsize
    ragged = (HW % _LANE) != 0
    cost = pl.CostEstimate(
        flops=int(B * (2 * C * HW + 4 * C * Cr + C * HW)),
        transcendentals=int(B * C),
        bytes_accessed=int(2 * B * C * HW * itemsize),
    )
    return pl.pallas_call(
        _make_fused_kernel(1.0 / hw, hw, ragged),
        out_shape=jax.ShapeDtypeStruct((B, C, HW), x_flat.dtype),
        grid=(B // bt,),
        in_specs=[
            pl.BlockSpec((bt, C, HW), lambda b: (b, 0, 0)),   # x, Bt batch elems
            pl.BlockSpec((C, Cr), lambda b: (0, 0)),          # w1^T (resident)
            pl.BlockSpec((1, Cr), lambda b: (0, 0)),          # b1
            pl.BlockSpec((Cr, C), lambda b: (0, 0)),          # w2^T
            pl.BlockSpec((1, C), lambda b: (0, 0)),           # b2
        ],
        out_specs=pl.BlockSpec((bt, C, HW), lambda b: (b, 0, 0)),
        cost_estimate=cost,
        compiler_params=pltpu.CompilerParams(
            dimension_semantics=("parallel",),
            vmem_limit_bytes=vmem_limit,
        ),
    )(x_flat, w1t, b1r, w2t, b2r)


# --------------------- two-pass fallback for large H*W ------------------------

def _make_pool_attn_kernel(inv_hw, hw, thw, ragged):
    def kernel(x_ref, w1t_ref, b1_ref, w2t_ref, b2_ref, y_ref, acc_ref):
        t = pl.program_id(1)

        @pl.when(t == 0)
        def _init():
            acc_ref[...] = jnp.zeros_like(acc_ref)

        x = x_ref[...]                                               # (1, C, thw)
        if ragged:
            # Ragged last grid block: out-of-bounds loads are unspecified, so
            # mask them out of the pooled sum.
            pos = t * thw + lax.broadcasted_iota(jnp.int32, x.shape, 2)
            x = jnp.where(pos < hw, x, jnp.zeros_like(x))
        acc_ref[...] += jnp.sum(x, axis=-1, dtype=jnp.float32)       # (1, C)

        @pl.when(t == pl.num_programs(1) - 1)
        def _finalize():
            pooled = acc_ref[...] * inv_hw                           # (1, C)
            y1 = jnp.maximum(
                jnp.dot(pooled, w1t_ref[...], preferred_element_type=jnp.float32)
                + b1_ref[...], 0.0)                                  # (1, Cr)
            y2 = jax.nn.sigmoid(
                jnp.dot(y1, w2t_ref[...], preferred_element_type=jnp.float32)
                + b2_ref[...])                                       # (1, C)
            y_ref[...] = y2[:, :, None]                              # (1, C, 1)
    return kernel


def _ca_apply_kernel(x_ref, y_ref, o_ref):
    x = x_ref[...]                                                   # (1, C, thw)
    # Writes to the ragged tail of the last output block are discarded by Pallas.
    o_ref[...] = (x * y_ref[...].astype(x.dtype)).astype(o_ref.dtype)


def _ca_two_pass(x_flat, w1t, b1r, w2t, b2r, hw, thw_a, thw_b, vmem_limit):
    B, C, HW = x_flat.shape
    Cr = w1t.shape[1]
    itemsize = x_flat.dtype.itemsize
    nt_a = _cdiv(HW, thw_a)
    nt_b = _cdiv(HW, thw_b)

    # pass A: per-batch channel attention vector; HW-tile axis is the innermost
    # ("arbitrary") grid axis, accumulation in a VMEM scratch.
    y = pl.pallas_call(
        _make_pool_attn_kernel(1.0 / hw, hw, thw_a, (HW % thw_a) != 0),
        out_shape=jax.ShapeDtypeStruct((B, C, 1), jnp.float32),
        grid=(B, nt_a),
        in_specs=[
            pl.BlockSpec((1, C, thw_a), lambda b, t: (b, 0, t)),
            pl.BlockSpec((C, Cr), lambda b, t: (0, 0)),
            pl.BlockSpec((1, Cr), lambda b, t: (0, 0)),
            pl.BlockSpec((Cr, C), lambda b, t: (0, 0)),
            pl.BlockSpec((1, C), lambda b, t: (0, 0)),
        ],
        out_specs=pl.BlockSpec((1, C, 1), lambda b, t: (b, 0, 0)),
        scratch_shapes=[pltpu.VMEM((1, C), jnp.float32)],
        cost_estimate=pl.CostEstimate(
            flops=int(B * (2 * C * HW + 4 * C * Cr)),
            transcendentals=int(B * C),
            bytes_accessed=int(B * C * HW * itemsize),
        ),
        compiler_params=pltpu.CompilerParams(
            dimension_semantics=("parallel", "arbitrary"),
            vmem_limit_bytes=vmem_limit,
        ),
    )(x_flat, w1t, b1r, w2t, b2r)

    # pass B: tiled broadcast multiply; attention vector block stays resident.
    out = pl.pallas_call(
        _ca_apply_kernel,
        out_shape=jax.ShapeDtypeStruct((B, C, HW), x_flat.dtype),
        grid=(B, nt_b),
        in_specs=[
            pl.BlockSpec((1, C, thw_b), lambda b, t: (b, 0, t)),
            pl.BlockSpec((1, C, 1), lambda b, t: (b, 0, 0)),
        ],
        out_specs=pl.BlockSpec((1, C, thw_b), lambda b, t: (b, 0, t)),
        cost_estimate=pl.CostEstimate(
            flops=int(B * C * HW),
            transcendentals=0,
            bytes_accessed=int(2 * B * C * HW * itemsize),
        ),
        compiler_params=pltpu.CompilerParams(
            dimension_semantics=("parallel", "parallel"),
            vmem_limit_bytes=vmem_limit,
        ),
    )(x_flat, y)
    return out


# ---------------------------------- wrapper -----------------------------------

@functools.partial(jax.jit, static_argnames=("block_bytes", "force_two_pass"))
def ca_layer(x, w1, b1, w2, b2, *, block_bytes=None, force_two_pass=False):
    """CALayer forward: x * sigmoid(w2 @ relu(w1 @ avgpool(x) + b1) + b2).

    x: (B, C, H, W); w1: (C//r, C[,1,1]); b1: (C//r,); w2: (C, C//r[,1,1]); b2: (C,)
    """
    B, C, H, W = x.shape
    Cr = w1.shape[0]
    HW = H * W
    itemsize = x.dtype.itemsize

    # pre-transpose 1x1-conv weights so in-kernel matmuls are plain row-major
    w1t = w1.reshape(Cr, C).T          # (C, Cr)
    w2t = w2.reshape(C, Cr).T          # (Cr, C)
    b1r = b1.reshape(1, Cr)
    b2r = b2.reshape(1, C)

    # pure reshape — no pad, no copy; ragged HW handled inside the kernels
    x_flat = x.reshape(B, C, HW)

    block_budget, vmem_limit = _vmem_budgets()
    if block_bytes is not None:
        block_budget = int(block_bytes)

    sub_c = _round_up(C, _SUBLANE)
    lanes_full = _cdiv(HW, _LANE)
    per_elem_vmem = sub_c * lanes_full * _LANE * itemsize   # VMEM bytes of one (C, HW) tile
    reserve = 2 * 1024 * 1024                               # weights/bias + compiler scratch

    # fused path whenever one batch element (2 in-bufs + 2 out-bufs) fits VMEM
    fused_ok = (not force_two_pass) and (4 * per_elem_vmem + reserve <= vmem_limit)

    if fused_ok:
        bt_cap_budget = max(1, block_budget // per_elem_vmem)
        bt_cap_vmem = max(1, (vmem_limit - reserve) // (4 * per_elem_vmem))
        bt = _pick_bt(B, min(B, bt_cap_budget, bt_cap_vmem))
        out_flat = _ca_fused(x_flat, w1t, b1r, w2t, b2r, HW, int(bt), vmem_limit)
    else:
        # large H*W: VMEM-size-independent two-pass HW tiling
        col_bytes = sub_c * _LANE * itemsize
        floor_bytes = min(2 * 1024 * 1024, block_budget)    # avoid tiny-tile cliff
        min_lanes = max(1, floor_bytes // col_bytes)
        max_lanes_b = max(1, (vmem_limit - 2 * reserve) // (4 * col_bytes))
        max_lanes_a = max(1, (vmem_limit - 2 * reserve) // (2 * col_bytes))
        lanes_b = min(lanes_full, max(min_lanes, block_budget // col_bytes), max_lanes_b)
        lanes_a = min(lanes_full, max(min_lanes, 2 * lanes_b), max_lanes_a)
        thw_b = HW if lanes_b * _LANE >= HW else lanes_b * _LANE
        thw_a = HW if lanes_a * _LANE >= HW else lanes_a * _LANE
        out_flat = _ca_two_pass(x_flat, w1t, b1r, w2t, b2r, HW,
                                int(thw_a), int(thw_b), vmem_limit)

    return out_flat.reshape(B, C, H, W)


def ca_layer_ref(x, w1, b1, w2, b2):
    pooled = jnp.mean(x, axis=(2, 3))                        # (B, C)
    y1 = jnp.maximum(pooled @ w1.T + b1, 0.0)                # (B, C//r)
    y2 = jax.nn.sigmoid(y1 @ w2.T + b2)                      # (B, C)
    return x * y2[:, :, None, None]


if __name__ == "__main__":
    key = jax.random.PRNGKey(0)
    k_x, k_w1, k_b1, k_w2, k_b2, k_x2, k_x3 = jax.random.split(key, 7)

    def mk_params(C, Cr):
        w1 = jax.random.normal(k_w1, (Cr, C), dtype=jnp.float32) * 0.1
        b1 = jax.random.normal(k_b1, (Cr,), dtype=jnp.float32) * 0.1
        w2 = jax.random.normal(k_w2, (C, Cr), dtype=jnp.float32) * 0.1
        b2 = jax.random.normal(k_b2, (C,), dtype=jnp.float32) * 0.1
        return w1, b1, w2, b2

    # --- test 1: canonical shape -> fused single-pass path (even grid) ---
    B, C, H, W = 2, 64, 16, 16
    Cr = C // 16
    x = jax.random.normal(k_x, (B, C, H, W), dtype=jnp.float32)
    w1, b1, w2, b2 = mk_params(C, Cr)
    out = jax.block_until_ready(ca_layer(x, w1, b1, w2, b2))
    ref = ca_layer_ref(x, w1, b1, w2, b2)
    assert out.shape == (B, C, H, W)
    assert jnp.allclose(out, ref, atol=3e-5, rtol=3e-5), "fused path mismatch"

    # --- test 2: non-128-multiple H*W on the fused path (full-extent block) ---
    B2, C2, H2, W2, r2 = 2, 32, 24, 24, 8
    Cr2 = C2 // r2
    x2 = jax.random.normal(k_x2, (B2, C2, H2, W2), dtype=jnp.float32)
    w1b, b1b, w2b, b2b = mk_params(C2, Cr2)
    out2 = jax.block_until_ready(ca_layer(x2, w1b, b1b, w2b, b2b))
    ref2 = ca_layer_ref(x2, w1b, b1b, w2b, b2b)
    assert out2.shape == (B2, C2, H2, W2)
    assert jnp.allclose(out2, ref2, atol=3e-5, rtol=3e-5), "fused ragged-HW mismatch"

    # --- test 3: forced two-pass fallback with small tiles + ragged last blocks ---
    out2b = jax.block_until_ready(
        ca_layer(x2, w1b, b1b, w2b, b2b, block_bytes=32 * 1024, force_two_pass=True))
    assert out2b.shape == (B2, C2, H2, W2)
    assert jnp.allclose(out2b, ref2, atol=3e-5, rtol=3e-5), "two-pass path mismatch"

    # --- test 4: larger batch -> fused path with Bt>1 (batched matmuls, even grid) ---
    B3 = 8
    x3 = jax.random.normal(k_x3, (B3, C2, 16, 16), dtype=jnp.float32)
    out3 = jax.block_until_ready(ca_layer(x3, w1b, b1b, w2b, b2b))
    ref3 = ca_layer_ref(x3, w1b, b1b, w2b, b2b)
    assert out3.shape == (B3, C2, 16, 16)
    assert jnp.allclose(out3, ref3, atol=3e-5, rtol=3e-5), "multi-batch block mismatch"

    print("KERNEL_OK")
</pallas_src>

<mosaic_0001>
module attributes {stable_mosaic.version = 11 : i64} {
  func.func @kernel(%arg0: i32, %arg1: memref<1x64x256xf32, #tpu.memory_space<vmem>>, %arg2: memref<64x4xf32, #tpu.memory_space<vmem>>, %arg3: memref<1x4xf32, #tpu.memory_space<vmem>>, %arg4: memref<4x64xf32, #tpu.memory_space<vmem>>, %arg5: memref<1x64xf32, #tpu.memory_space<vmem>>, %arg6: memref<1x64x256xf32, #tpu.memory_space<vmem>>) attributes {dimension_semantics = [#tpu.dimension_semantics<parallel>], iteration_bounds = array<i64: 2>, scalar_prefetch = 0 : i64, scratch_operands = 0 : i64, tpu.core_type = #tpu.core_type<tc>, window_params = [{transform_indices = @transform_0, window_bounds = array<i64: 1, 64, 256>}, {pipeline_mode = #tpu.pipeline_mode<synchronous>, transform_indices = @transform_1, window_bounds = array<i64: 64, 4>}, {pipeline_mode = #tpu.pipeline_mode<synchronous>, transform_indices = @transform_2, window_bounds = array<i64: 1, 4>}, {pipeline_mode = #tpu.pipeline_mode<synchronous>, transform_indices = @transform_3, window_bounds = array<i64: 4, 64>}, {pipeline_mode = #tpu.pipeline_mode<synchronous>, transform_indices = @transform_4, window_bounds = array<i64: 1, 64>}, {transform_indices = @transform_5, window_bounds = array<i64: 1, 64, 256>}]} {
    %c0 = arith.constant 0 : index
    %c0_0 = arith.constant 0 : index
    %c0_1 = arith.constant 0 : index
    %0 = vector.load %arg1[%c0, %c0_0, %c0_1] : memref<1x64x256xf32, #tpu.memory_space<vmem>>, vector<1x64x256xf32>
    %cst = arith.constant dense<0.000000e+00> : vector<1x64xf32>
    %1 = vector.multi_reduction <add>, %0, %cst [2] : vector<1x64x256xf32> to vector<1x64xf32>
    %cst_2 = arith.constant 3.906250e-03 : f32
    %2 = vector.broadcast %cst_2 : f32 to vector<1x64xf32>
    %3 = arith.mulf %1, %2 : vector<1x64xf32>
    %c0_3 = arith.constant 0 : index
    %c0_4 = arith.constant 0 : index
    %4 = vector.load %arg2[%c0_3, %c0_4] : memref<64x4xf32, #tpu.memory_space<vmem>>, vector<64x4xf32>
    %cst_5 = arith.constant dense<0.000000e+00> : vector<1x4xf32>
    %5 = tpu.matmul %3, %4, %cst_5 {dimension_numbers = #tpu.dot_dimension_numbers<[1], [0], [0], [1], [0, 0, 1, 1], [], []>} : vector<1x64xf32>, vector<64x4xf32>, vector<1x4xf32> -> vector<1x4xf32>
    %c0_6 = arith.constant 0 : index
    %c0_7 = arith.constant 0 : index
    %6 = vector.load %arg3[%c0_6, %c0_7] : memref<1x4xf32, #tpu.memory_space<vmem>>, vector<1x4xf32>
    %7 = arith.addf %5, %6 : vector<1x4xf32>
    %cst_8 = arith.constant 0.000000e+00 : f32
    %8 = vector.broadcast %cst_8 : f32 to vector<1x4xf32>
    %9 = arith.maximumf %7, %8 : vector<1x4xf32>
    %c0_9 = arith.constant 0 : index
    %c0_10 = arith.constant 0 : index
    %10 = vector.load %arg4[%c0_9, %c0_10] : memref<4x64xf32, #tpu.memory_space<vmem>>, vector<4x64xf32>
    %cst_11 = arith.constant dense<0.000000e+00> : vector<1x64xf32>
    %11 = tpu.matmul %9, %10, %cst_11 {dimension_numbers = #tpu.dot_dimension_numbers<[1], [0], [0], [1], [0, 0, 1, 1], [], []>} : vector<1x4xf32>, vector<4x64xf32>, vector<1x64xf32> -> vector<1x64xf32>
    %c0_12 = arith.constant 0 : index
    %c0_13 = arith.constant 0 : index
    %12 = vector.load %arg5[%c0_12, %c0_13] : memref<1x64xf32, #tpu.memory_space<vmem>>, vector<1x64xf32>
    %13 = arith.addf %11, %12 : vector<1x64xf32>
    %14 = arith.negf %13 : vector<1x64xf32>
    %15 = math.exp %14 : vector<1x64xf32>
    %cst_14 = arith.constant 1.000000e+00 : f32
    %16 = vector.broadcast %cst_14 : f32 to vector<1x64xf32>
    %17 = arith.addf %16, %15 : vector<1x64xf32>
    %18 = arith.divf %16, %17 : vector<1x64xf32>
    %19 = vector.shape_cast %18 : vector<1x64xf32> to vector<1x64x1xf32>
    %c0_15 = arith.constant 0 : index
    %c0_16 = arith.constant 0 : index
    %c0_17 = arith.constant 0 : index
    %20 = vector.load %arg1[%c0_15, %c0_16, %c0_17] : memref<1x64x256xf32, #tpu.memory_space<vmem>>, vector<1x64x256xf32>
    %21 = vector.broadcast %19 : vector<1x64x1xf32> to vector<1x64x256xf32>
    %22 = arith.mulf %20, %21 : vector<1x64x256xf32>
    %c0_18 = arith.constant 0 : index
    %c0_19 = arith.constant 0 : index
    %c0_20 = arith.constant 0 : index
    %23 = vector.load %arg6[%c0_18, %c0_19, %c0_20] : memref<1x64x256xf32, #tpu.memory_space<vmem>>, vector<1x64x256xf32>
    tpu.vector_store %arg6[%c0_18, %c0_19, %c0_20], %22 {strides = array<i32>} : memref<1x64x256xf32, #tpu.memory_space<vmem>>, vector<1x64x256xf32>,
    return
  }
  func.func @transform_0(%arg0: i32) -> (i32, i32, i32) {
    %c0_i32 = arith.constant 0 : i32
    %c0_i32_0 = arith.constant 0 : i32
    %c0_i32_1 = arith.constant 0 : i32
    return %arg0, %c0_i32, %c0_i32_0 : i32, i32, i32
  }
  func.func @transform_1(%arg0: i32) -> (i32, i32) {
    %c0_i32 = arith.constant 0 : i32
    %c0_i32_0 = arith.constant 0 : i32
    %c0_i32_1 = arith.constant 0 : i32
    return %c0_i32, %c0_i32_0 : i32, i32
  }
  func.func @transform_2(%arg0: i32) -> (i32, i32) {
    %c0_i32 = arith.constant 0 : i32
    %c0_i32_0 = arith.constant 0 : i32
    %c0_i32_1 = arith.constant 0 : i32
    return %c0_i32, %c0_i32_0 : i32, i32
  }
  func.func @transform_3(%arg0: i32) -> (i32, i32) {
    %c0_i32 = arith.constant 0 : i32
    %c0_i32_0 = arith.constant 0 : i32
    %c0_i32_1 = arith.constant 0 : i32
    return %c0_i32, %c0_i32_0 : i32, i32
  }
  func.func @transform_4(%arg0: i32) -> (i32, i32) {
    %c0_i32 = arith.constant 0 : i32
    %c0_i32_0 = arith.constant 0 : i32
    %c0_i32_1 = arith.constant 0 : i32
    return %c0_i32, %c0_i32_0 : i32, i32
  }
  func.func @transform_5(%arg0: i32) -> (i32, i32, i32) {
    %c0_i32 = arith.constant 0 : i32
    %c0_i32_0 = arith.constant 0 : i32
    %c0_i32_1 = arith.constant 0 : i32
    return %arg0, %c0_i32, %c0_i32_0 : i32, i32, i32
  }
}

</mosaic_0001>

<llo_original>
// kernel: ca_layer.1
$region0: #{ca_layer.1}
  #allocation0 [shape = 'u32[]', space=smem, size = 0x4, offset = 0x4, fixed_abs, tag = 'smem constant byte address 0x4 - core index']
  #allocation1 [shape = 'u32[144,128]{1,0:T(1,128)}', space=vmem, size = 0x12000, scoped, tag = 'internal scratch']
  %s0 = inlined_call_operand.vmem [shape: f32[2,64,256], index: 0, kind: input, shape index: {}]
  %s1 = inlined_call_operand.vmem [shape: f32[64,4], index: 1, kind: input, shape index: {}]
  %s2 = inlined_call_operand.vmem [shape: f32[1,4], index: 2, kind: input, shape index: {}]
  %s3 = inlined_call_operand.vmem [shape: f32[4,64], index: 3, kind: input, shape index: {}]
  %s4 = inlined_call_operand.vmem [shape: f32[1,64], index: 4, kind: input, shape index: {}]
  %s5 = inlined_call_operand.vmem [shape: f32[2,64,256], index: 5, kind: output, shape index: {}]
  %s6 = sld [smem:[#allocation0]]
  $region53: #{ca_layer.1} parent=0
    _
  %s8 = ssub.s32 1, %s6
  %s9 = scalar_select 0, %s8, %s6
  loop: start=0, step=1, limit=4
  $region2: #{ca_layer.1} parent=0 // loop_pre_header
    _
  $region3: #{ca_layer.1} parent=0 // loop_header
    %s11 = sphi 0, %s15
    %p12 = scmp.ge.s32.totalorder %s11, 4
    %s21 = sphi 0, %s23
    %s24 = sphi 0, %s21
    %s25 = sphi 0, %s24
    %s41 = sphi 0, %s25
    %s45 = sphi 0, %s45
    %s47 = sphi 0, %s45
    %s48 = sphi 0, %s47
    %s62 = sphi 0, %s48
    %s66 = sphi 0, %s66
    %s68 = sphi 0, %s66
    %s69 = sphi 0, %s68
    %s83 = sphi 0, %s69
    %s87 = sphi 0, %s87
    %s89 = sphi 0, %s87
    %s90 = sphi 0, %s89
    %s104 = sphi 0, %s90
    %s108 = sphi 0, %s108
    %s110 = sphi 0, %s108
    %s111 = sphi 0, %s110
    %s125 = sphi 0, %s111
    %s131 = sphi 0, %s133
    %s134 = sphi 0, %s131
    %s135 = sphi 0, %s134
    %s151 = sphi 0, %s135
  $region4: #{ca_layer.1} parent=0 // loop_header_branch
    %14 = sbr.rel (%p12) target = $region8
  $region5: #{ca_layer.1} parent=0 // loop_body
    %s16 = ssub.s32 %s11, 1
    %s17 = ssub.s32 %s11, 2
    %s18 = sadd.s32 %s11, 1
    %s19 = ssub.s32 %s11, %s18
    %p20 = scmp.eq.s32.totalorder %s19, 0
    %s22 = sadd.s32 %s21, 1
    %s23 = scalar_select %p20, %s21, %s22
    %p26 = pneg %p20
    %p27 = scmp.eq.s32.totalorder %s11, 1
    %p28 = por %p26, %p27
    %p29 = scmp.ne.s32.totalorder %s21, %s24
    %p30 = scmp.eq.s32.totalorder %s11, 0
    %p31 = por %p29, %p30
    %p32 = scmp.ne.s32.totalorder %s21, %s24
    %p33 = scmp.eq.s32.totalorder %s16, 1
    %p34 = por %p32, %p33
    %p35 = scmp.ne.s32.totalorder %s24, %s25
    %p36 = scmp.eq.s32.totalorder %s16, 0
    %p37 = por %p35, %p36
    %p38 = scmp.ne.s32.totalorder %s24, %s25
    %p39 = scmp.eq.s32.totalorder %s17, 1
    %p40 = por %p38, %p39
    %p42 = scmp.ne.s32.totalorder %s25, %s41
    %p43 = scmp.eq.s32.totalorder %s17, 0
    %p44 = por %p42, %p43
    %s46 = sadd.s32 %s45, 1
    %p49 = scmp.eq.s32.totalorder %s11, 1
    %p50 = scmp.ne.s32.totalorder %s45, %s47
    %p51 = scmp.eq.s32.totalorder %s11, 0
    %p52 = por %p50, %p51
    %p53 = scmp.ne.s32.totalorder %s45, %s47
    %p54 = scmp.eq.s32.totalorder %s16, 1
    %p55 = por %p53, %p54
    %p56 = scmp.ne.s32.totalorder %s47, %s48
    %p57 = scmp.eq.s32.totalorder %s16, 0
    %p58 = por %p56, %p57
    %p59 = scmp.ne.s32.totalorder %s47, %s48
    %p60 = scmp.eq.s32.totalorder %s17, 1
    %p61 = por %p59, %p60
    %p63 = scmp.ne.s32.totalorder %s48, %s62
    %p64 = scmp.eq.s32.totalorder %s17, 0
    %p65 = por %p63, %p64
    %s67 = sadd.s32 %s66, 1
    %p70 = scmp.eq.s32.totalorder %s11, 1
    %p71 = scmp.ne.s32.totalorder %s66, %s68
    %p72 = scmp.eq.s32.totalorder %s11, 0
    %p73 = por %p71, %p72
    %p74 = scmp.ne.s32.totalorder %s66, %s68
    %p75 = scmp.eq.s32.totalorder %s16, 1
    %p76 = por %p74, %p75
    %p77 = scmp.ne.s32.totalorder %s68, %s69
    %p78 = scmp.eq.s32.totalorder %s16, 0
    %p79 = por %p77, %p78
    %p80 = scmp.ne.s32.totalorder %s68, %s69
    %p81 = scmp.eq.s32.totalorder %s17, 1
    %p82 = por %p80, %p81
    %p84 = scmp.ne.s32.totalorder %s69, %s83
    %p85 = scmp.eq.s32.totalorder %s17, 0
    %p86 = por %p84, %p85
    %s88 = sadd.s32 %s87, 1
    %p91 = scmp.eq.s32.totalorder %s11, 1
    %p92 = scmp.ne.s32.totalorder %s87, %s89
    %p93 = scmp.eq.s32.totalorder %s11, 0
    %p94 = por %p92, %p93
    %p95 = scmp.ne.s32.totalorder %s87, %s89
    %p96 = scmp.eq.s32.totalorder %s16, 1
    %p97 = por %p95, %p96
    %p98 = scmp.ne.s32.totalorder %s89, %s90
    %p99 = scmp.eq.s32.totalorder %s16, 0
    %p100 = por %p98, %p99
    %p101 = scmp.ne.s32.totalorder %s89, %s90
    %p102 = scmp.eq.s32.totalorder %s17, 1
    %p103 = por %p101, %p102
    %p105 = scmp.ne.s32.totalorder %s90, %s104
    %p106 = scmp.eq.s32.totalorder %s17, 0
    %p107 = por %p105, %p106
    %s109 = sadd.s32 %s108, 1
    %p112 = scmp.eq.s32.totalorder %s11, 1
    %p113 = scmp.ne.s32.totalorder %s108, %s110
    %p114 = scmp.eq.s32.totalorder %s11, 0
    %p115 = por %p113, %p114
    %p116 = scmp.ne.s32.totalorder %s108, %s110
    %p117 = scmp.eq.s32.totalorder %s16, 1
    %p118 = por %p116, %p117
    %p119 = scmp.ne.s32.totalorder %s110, %s111
    %p120 = scmp.eq.s32.totalorder %s16, 0
    %p121 = por %p119, %p120
    %p122 = scmp.ne.s32.totalorder %s110, %s111
    %p123 = scmp.eq.s32.totalorder %s17, 1
    %p124 = por %p122, %p123
    %p126 = scmp.ne.s32.totalorder %s111, %s125
    %p127 = scmp.eq.s32.totalorder %s17, 0
    %p128 = por %p126, %p127
    %s129 = ssub.s32 %s11, %s18
    %p130 = scmp.eq.s32.totalorder %s129, 0
    %s132 = sadd.s32 %s131, 1
    %s133 = scalar_select %p130, %s131, %s132
    %p136 = pneg %p130
    %p137 = scmp.eq.s32.totalorder %s11, 1
    %p138 = por %p136, %p137
    %p139 = scmp.ne.s32.totalorder %s131, %s134
    %p140 = scmp.eq.s32.totalorder %s11, 0
    %p141 = por %p139, %p140
    %p142 = scmp.ne.s32.totalorder %s131, %s134
    %p143 = scmp.eq.s32.totalorder %s16, 1
    %p144 = por %p142, %p143
    %p145 = scmp.ne.s32.totalorder %s134, %s135
    %p146 = scmp.eq.s32.totalorder %s16, 0
    %p147 = por %p145, %p146
    %p148 = scmp.ne.s32.totalorder %s134, %s135
    %p149 = scmp.eq.s32.totalorder %s17, 1
    %p150 = por %p148, %p149
    %p152 = scmp.ne.s32.totalorder %s135, %s151
    %p153 = scmp.eq.s32.totalorder %s17, 0
    %p154 = por %p152, %p153
    %p155 = scmp.le.s32.totalorder 1, %s11
    %p156 = scmp.lt.s32.totalorder %s11, 3
    %p157 = pnand %p155, %p156
    %p158 = pneg %p157
    // Predicated region
    $region9: #{ca_layer.1} parent=5 // pred_check
      _
    $region10: #{ca_layer.1} parent=5 // pred_check_branch
      %160 = sbr.rel (%p157) target = $region12
    $region11: #{ca_layer.1} parent=5 // pred_region
      %s161 = ssub.s32 %s11, 1
      // Predicated region
      $region13: #{ca_layer.1} parent=11 // pred_check
        %p162 = pneg %p58
      $region14: #{ca_layer.1} parent=11 // pred_check_branch
        %164 = sbr.rel (%p162) target = $region16
      $region15: #{ca_layer.1} parent=11 // pred_region
        _
      $region16: #{ca_layer.1} parent=11 // pred_fallthru
        _
      // Predicated region
      $region17: #{ca_layer.1} parent=11 // pred_check
        %p165 = pneg %p79
      $region18: #{ca_layer.1} parent=11 // pred_check_branch
        %167 = sbr.rel (%p165) target = $region20
      $region19: #{ca_layer.1} parent=11 // pred_region
        _
      $region20: #{ca_layer.1} parent=11 // pred_fallthru
        _
      // Predicated region
      $region21: #{ca_layer.1} parent=11 // pred_check
        %p168 = pneg %p100
      $region22: #{ca_layer.1} parent=11 // pred_check_branch
        %170 = sbr.rel (%p168) target = $region24
      $region23: #{ca_layer.1} parent=11 // pred_region
        _
      $region24: #{ca_layer.1} parent=11 // pred_fallthru
        _
      // Predicated region
      $region25: #{ca_layer.1} parent=11 // pred_check
        %p171 = pneg %p121
      $region26: #{ca_layer.1} parent=11 // pred_check_branch
        %173 = sbr.rel (%p171) target = $region28
      $region27: #{ca_layer.1} parent=11 // pred_region
        _
      $region28: #{ca_layer.1} parent=11 // pred_fallthru
        _
    $region12: #{ca_layer.1} parent=5 // pred_fallthru
      _
    %p174 = scmp.lt.s32.totalorder %s11, 2
    // Predicated region
    $region29: #{ca_layer.1} parent=5 // pred_check
      %p175 = pneg %p174
    $region30: #{ca_layer.1} parent=5 // pred_check_branch
      %177 = sbr.rel (%p175) target = $region32
    $region31: #{ca_layer.1} parent=5 // pred_region
      // Predicated region
      $region33: #{ca_layer.1} parent=31 // pred_check
        %p178 = pneg %p31
      $region34: #{ca_layer.1} parent=31 // pred_check_branch
        %180 = sbr.rel (%p178) target = $region36
      $region35: #{ca_layer.1} parent=31 // pred_region
        %p181 = scmp.lt.s32.totalorder %s11, 1
        %s182 = scalar_select %p181, %s11, 1
        %s183 = smul.addr %s182, 16
        %s184 = smul.addr %s183, 8
        %s185 = scalar_lea.vmem %s0, %s184
      $region36: #{ca_layer.1} parent=31 // pred_fallthru
        _
    $region32: #{ca_layer.1} parent=5 // pred_fallthru
      _
    %p186 = scmp.le.s32.totalorder 1, %s11
    %p187 = scmp.lt.s32.totalorder %s11, 3
    %p188 = pnand %p186, %p187
    %p189 = pneg %p188
    // Predicated region
    $region37: #{ca_layer.1} parent=5 // pred_check
      _
    $region38: #{ca_layer.1} parent=5 // pred_check_branch
      %191 = sbr.rel (%p188) target = $region40
    $region39: #{ca_layer.1} parent=5 // pred_region
      %s192 = ssub.s32 %s11, 1
      %p193 = scmp.lt.s32.totalorder %s16, 1
      %s194 = scalar_select %p193, %s16, 1
      %s195 = smul.addr %s194, 16
      %s196 = smul.addr %s195, 8
      %s197 = scalar_lea.vmem %s0, %s196
      %p198 = pneg %p37
      %p199 = pneg %p34
      %p200 = pneg %p58
      %p201 = pneg %p55
      %p202 = pneg %p79
      %p203 = pneg %p76
      %p204 = pneg %p100
      %p205 = pneg %p97
      %p206 = pneg %p121
      %p207 = pneg %p118
      %p208 = pneg %p147
      %p209 = pneg %p144
      %p210 = scmp.lt.s32.totalorder %s16, 1
      %s211 = scalar_select %p210, %s16, 1
      %s212 = smul.addr %s211, 16
      %s213 = smul.addr %s212, 8
      %s214 = scalar_lea.vmem %s5, %s213
      %p215 = scmp.lt.s32.totalorder %s16, 1
      %s216 = scalar_select %p215, %s16, 1
      %s217 = smul.addr %s216, 16
      %s218 = smul.addr %s217, 8
      %s219 = scalar_lea.vmem %s0, %s218
      %p220 = scmp.lt.s32.totalorder %s16, 1
      %s221 = scalar_select %p220, %s16, 1
      %s222 = smul.addr %s221, 16
      %s223 = smul.addr %s222, 8
      %s224 = scalar_lea.vmem %s5, %s223
      %v225 = vld [vmem:[%s219] sm:$0xff]
      %v226 = vld [vmem:[%s219 + $0x8] sm:$0xff]
      %v227 = vld [vmem:[%s219 + $0x10] sm:$0xff]
      %v228 = vld [vmem:[%s219 + $0x18] sm:$0xff]
      %v229 = vld [vmem:[%s219 + $0x20] sm:$0xff]
      %v230 = vld [vmem:[%s219 + $0x28] sm:$0xff]
      %v231 = vld [vmem:[%s219 + $0x30] sm:$0xff]
      %v232 = vld [vmem:[%s219 + $0x38] sm:$0xff]
      %v233 = vld [vmem:[%s219 + $0x40] sm:$0xff]
      %v234 = vld [vmem:[%s219 + $0x48] sm:$0xff]
      %v235 = vld [vmem:[%s219 + $0x50] sm:$0xff]
      %v236 = vld [vmem:[%s219 + $0x58] sm:$0xff]
      %v237 = vld [vmem:[%s219 + $0x60] sm:$0xff]
      %v238 = vld [vmem:[%s219 + $0x68] sm:$0xff]
      %v239 = vld [vmem:[%s219 + $0x70] sm:$0xff]
      %v240 = vld [vmem:[%s219 + $0x78] sm:$0xff]
      %v241 = vadd.f32 %v225, %v226
      %242 = vadd.xlane.f32.xlu0 %v241
      %v243 = vpop.xlane.xlu0 %242
      %v244 = vadd.f32 %v227, %v228
      %245 = vadd.xlane.f32.xlu0 %v244
      %v246 = vpop.xlane.xlu0 %245
      %v247 = vadd.f32 %v229, %v230
      %248 = vadd.xlane.f32.xlu0 %v247
      %v249 = vpop.xlane.xlu0 %248
      %v250 = vadd.f32 %v231, %v232
      %251 = vadd.xlane.f32.xlu0 %v250
      %v252 = vpop.xlane.xlu0 %251
      %v253 = vadd.f32 %v233, %v234
      %254 = vadd.xlane.f32.xlu0 %v253
      %v255 = vpop.xlane.xlu0 %254
      %v256 = vadd.f32 %v235, %v236
      %257 = vadd.xlane.f32.xlu0 %v256
      %v258 = vpop.xlane.xlu0 %257
      %v259 = vadd.f32 %v237, %v238
      %260 = vadd.xlane.f32.xlu0 %v259
      %v261 = vpop.xlane.xlu0 %260
      %v262 = vadd.f32 %v239, %v240
      %263 = vadd.xlane.f32.xlu0 %v262
      %v264 = vpop.xlane.xlu0 %263
      %v265 = vmul.f32 %v243, 0.00390625
      %v266 = vmul.f32 %v246, 0.00390625
      %v267 = vmul.f32 %v249, 0.00390625
      %v268 = vmul.f32 %v252, 0.00390625
      %v269 = vmul.f32 %v255, 0.00390625
      %v270 = vmul.f32 %v258, 0.00390625
      %v271 = vmul.f32 %v261, 0.00390625
      %v272 = vmul.f32 %v264, 0.00390625
      %v273 = vld [vmem:[%s1] sm:$0xff]
      %v274 = vld [vmem:[%s1 + $0x8] sm:$0xff]
      %v275 = vld [vmem:[%s1 + $0x10] sm:$0xff]
      %v276 = vld [vmem:[%s1 + $0x18] sm:$0xff]
      %v277 = vld [vmem:[%s1 + $0x20] sm:$0xff]
      %v278 = vld [vmem:[%s1 + $0x28] sm:$0xff]
      %v279 = vld [vmem:[%s1 + $0x30] sm:$0xff]
      %v280 = vld [vmem:[%s1 + $0x38] sm:$0xff]
      %v281 = vld [vmem:[%s2] sm:$0x1]
      %v290 = vlaneseq
      %v291 = vand.u32 %v290, 127
      %v292 = vlaneseq
      %v293 = vshrl.u32 %v292, 7
      %v294 = vsub.s32 %v291, %v293
      %v295 = vrot.slane %v265, %v294
      %v296 = vadd.s32 %v291, 4294967288
      %v297 = vlaneseq
      %v298 = vshrl.u32 %v297, 7
      %v299 = vsub.s32 %v296, %v298
      %v300 = vrot.slane %v266, %v299
      %vm301 = vcmask 130112
      %v302 = vsel %vm301, %v300, %v295
      %v303 = vadd.s32 %v291, 4294967280
      %v304 = vlaneseq
      %v305 = vshrl.u32 %v304, 7
      %v306 = vsub.s32 %v303, %v305
      %v307 = vrot.slane %v267, %v306
      %vm308 = vcmask 195712
      %v309 = vsel %vm308, %v307, %v302
      %v310 = vadd.s32 %v291, 4294967272
      %v311 = vlaneseq
      %v312 = vshrl.u32 %v311, 7
      %v313 = vsub.s32 %v310, %v312
      %v314 = vrot.slane %v268, %v313
      %vm315 = vcmask 261312
      %v316 = vsel %vm315, %v314, %v309
      %v317 = vadd.s32 %v291, 4294967264
      %v318 = vlaneseq
      %v319 = vshrl.u32 %v318, 7
      %v320 = vsub.s32 %v317, %v319
      %v321 = vrot.slane %v269, %v320
      %vm322 = vcmask 326912
      %v323 = vsel %vm322, %v321, %v316
      %v324 = vadd.s32 %v291, 4294967256
      %v325 = vlaneseq
      %v326 = vshrl.u32 %v325, 7
      %v327 = vsub.s32 %v324, %v326
      %v328 = vrot.slane %v270, %v327
      %vm329 = vcmask 392512
      %v330 = vsel %vm329, %v328, %v323
      %v331 = vadd.s32 %v291, 4294967248
      %v332 = vlaneseq
      %v333 = vshrl.u32 %v332, 7
      %v334 = vsub.s32 %v331, %v333
      %v335 = vrot.slane %v271, %v334
      %vm336 = vcmask 458112
      %v337 = vsel %vm336, %v335, %v330
      %v338 = vadd.s32 %v291, 4294967240
      %v339 = vlaneseq
      %v340 = vshrl.u32 %v339, 7
      %v341 = vsub.s32 %v338, %v340
      %v342 = vrot.slane %v272, %v341
      %vm343 = vcmask 523712
      %v344 = vsel %vm343, %v342, %v337
      %vm345 = vcmask 523264
      %v346 = vsel %vm345, %v344, 0
      %348 = vmatprep.subr.mxu0 0.0
      %349 = vmatpush1.msra.mxu0 0.0
      %350 = vmatprep.subr.mxu0 0.0
      %351 = vmatpush1.msra.mxu0 0.0
      %352 = vmatprep.subr.mxu0 0.0
      %353 = vmatpush1.msra.mxu0 0.0
      %354 = vmatprep.subr.mxu0 0.0
      %355 = vmatpush1.msra.mxu0 0.0
      %356 = vmatprep.subr.mxu0 0.0
      %357 = vmatpush1.msra.mxu0 0.0
      %358 = vmatprep.subr.mxu0 0.0
      %359 = vmatpush1.msra.mxu0 0.0
      %360 = vmatprep.subr.mxu0 0.0
      %361 = vmatpush1.msra.mxu0 0.0
      %362 = vmatprep.subr.mxu0 0.0
      %363 = vmatpush1.msra.mxu0 0.0
      %364 = vmatprep.subr.mxu0 0.0
      %365 = vmatpush1.msra.mxu0 %v280
      %366 = vmatprep.subr.mxu0 0.0
      %367 = vmatpush1.msra.mxu0 %v279
      %368 = vmatprep.subr.mxu0 0.0
      %369 = vmatpush1.msra.mxu0 %v278
      %370 = vmatprep.subr.mxu0 0.0
      %371 = vmatpush1.msra.mxu0 %v277
      %372 = vmatprep.subr.mxu0 0.0
      %373 = vmatpush1.msra.mxu0 %v276
      %374 = vmatprep.subr.mxu0 0.0
      %375 = vmatpush1.msra.mxu0 %v275
      %376 = vmatprep.subr.mxu0 0.0
      %377 = vmatpush1.msra.mxu0 %v274
      %378 = vmatprep.subr.mxu0 0.0
      %379 = vmatpush1.msra.mxu0 %v273
      %380 = vmatprep.subr.mxu0 0.0
      %381 = vmatpush2.msra.mxu0 0.0
      %382 = vmatprep.subr.mxu0 0.0
      %383 = vmatpush2.msra.mxu0 0.0
      %384 = vmatprep.subr.mxu0 0.0
      %385 = vmatpush2.msra.mxu0 0.0
      %386 = vmatprep.subr.mxu0 0.0
      %387 = vmatpush2.msra.mxu0 0.0
      %388 = vmatprep.subr.mxu0 0.0
      %389 = vmatpush2.msra.mxu0 0.0
      %390 = vmatprep.subr.mxu0 0.0
      %391 = vmatpush2.msra.mxu0 0.0
      %392 = vmatprep.subr.mxu0 0.0
      %393 = vmatpush2.msra.mxu0 0.0
      %394 = vmatprep.subr.mxu0 0.0
      %395 = vmatpush2.msra.mxu0 0.0
      %396 = vmatprep.subr.mxu0 0.0
      %397 = vmatpush2.msra.mxu0 0.0
      %398 = vmatprep.subr.mxu0 0.0
      %399 = vmatpush2.msra.mxu0 0.0
      %400 = vmatprep.subr.mxu0 0.0
      %401 = vmatpush2.msra.mxu0 0.0
      %402 = vmatprep.subr.mxu0 0.0
      %403 = vmatpush2.msra.mxu0 0.0
      %404 = vmatprep.subr.mxu0 0.0
      %405 = vmatpush2.msra.mxu0 0.0
      %406 = vmatprep.subr.mxu0 0.0
      %407 = vmatpush2.msra.mxu0 0.0
      %408 = vmatprep.subr.mxu0 0.0
      %409 = vmatpush2.msra.mxu0 0.0
      %410 = vmatprep.subr.mxu0 0.0
      %411 = vmatpush2.msra.mxu0 0.0
      %412 = vmatprep.mubr.f32.mxu0 0.0
      %413 = vmatmul.mubr.f32.gmra.mxu0 %v346
      %v414 = vpop.f32.mrf.mxu0
      %v415 = vadd.f32 %v281, %v414
      %v416 = vpop.f32.mrf.mxu0
      %417 = vdwg.mxu0
      %v418 = vmax.f32 %v415, 0.0
      %v419 = vld [vmem:[%s3] sm:$0xf]
      %v420 = vld [vmem:[%s4] sm:$0x1]
      %vm421 = vcmask 31744
      %v423 = vsel %vm421, %v418, 0
      %vm425 = vcmask 1043456
      %v427 = vsel %vm425, %v419, 0
      %429 = vmatprep.subr.mxu0 0.0
      %430 = vmatpush1.msra.mxu0 0.0
      %431 = vmatprep.subr.mxu0 0.0
      %432 = vmatpush1.msra.mxu0 0.0
      %433 = vmatprep.subr.mxu0 0.0
      %434 = vmatpush1.msra.mxu0 0.0
      %435 = vmatprep.subr.mxu0 0.0
      %436 = vmatpush1.msra.mxu0 0.0
      %437 = vmatprep.subr.mxu0 0.0
      %438 = vmatpush1.msra.mxu0 0.0
      %439 = vmatprep.subr.mxu0 0.0
      %440 = vmatpush1.msra.mxu0 0.0
      %441 = vmatprep.subr.mxu0 0.0
      %442 = vmatpush1.msra.mxu0 0.0
      %443 = vmatprep.subr.mxu0 0.0
      %444 = vmatpush1.msra.mxu0 0.0
      %445 = vmatprep.subr.mxu0 0.0
      %446 = vmatpush1.msra.mxu0 0.0
      %447 = vmatprep.subr.mxu0 0.0
      %448 = vmatpush1.msra.mxu0 0.0
      %449 = vmatprep.subr.mxu0 0.0
      %450 = vmatpush1.msra.mxu0 0.0
      %451 = vmatprep.subr.mxu0 0.0
      %452 = vmatpush1.msra.mxu0 0.0
      %453 = vmatprep.subr.mxu0 0.0
      %454 = vmatpush1.msra.mxu0 0.0
      %455 = vmatprep.subr.mxu0 0.0
      %456 = vmatpush1.msra.mxu0 0.0
      %457 = vmatprep.subr.mxu0 0.0
      %458 = vmatpush1.msra.mxu0 0.0
      %459 = vmatprep.subr.mxu0 0.0
      %460 = vmatpush1.msra.mxu0 %v427
      %461 = vmatprep.subr.mxu0 0.0
      %462 = vmatpush2.msra.mxu0 0.0
      %463 = vmatprep.subr.mxu0 0.0
      %464 = vmatpush2.msra.mxu0 0.0
      %465 = vmatprep.subr.mxu0 0.0
      %466 = vmatpush2.msra.mxu0 0.0
      %467 = vmatprep.subr.mxu0 0.0
      %468 = vmatpush2.msra.mxu0 0.0
      %469 = vmatprep.subr.mxu0 0.0
      %470 = vmatpush2.msra.mxu0 0.0
      %471 = vmatprep.subr.mxu0 0.0
      %472 = vmatpush2.msra.mxu0 0.0
      %473 = vmatprep.subr.mxu0 0.0
      %474 = vmatpush2.msra.mxu0 0.0
      %475 = vmatprep.subr.mxu0 0.0
      %476 = vmatpush2.msra.mxu0 0.0
      %477 = vmatprep.subr.mxu0 0.0
      %478 = vmatpush2.msra.mxu0 0.0
      %479 = vmatprep.subr.mxu0 0.0
      %480 = vmatpush2.msra.mxu0 0.0
      %481 = vmatprep.subr.mxu0 0.0
      %482 = vmatpush2.msra.mxu0 0.0
      %483 = vmatprep.subr.mxu0 0.0
      %484 = vmatpush2.msra.mxu0 0.0
      %485 = vmatprep.subr.mxu0 0.0
      %486 = vmatpush2.msra.mxu0 0.0
      %487 = vmatprep.subr.mxu0 0.0
      %488 = vmatpush2.msra.mxu0 0.0
      %489 = vmatprep.subr.mxu0 0.0
      %490 = vmatpush2.msra.mxu0 0.0
      %491 = vmatprep.subr.mxu0 0.0
      %492 = vmatpush2.msra.mxu0 0.0
      %493 = vmatprep.mubr.f32.mxu0 0.0
      %494 = vmatmul.mubr.f32.gmra.mxu0 %v423
      %v495 = vpop.f32.mrf.mxu0
      %v496 = vadd.f32 %v420, %v495
      %v497 = vpop.f32.mrf.mxu0
      %498 = vdwg.mxu0
      %v499 = vxor.u32 %v496, 2147483648
      %v500 = vmul.f32 %v499, 1.442695
      %v501 = vpow.pop %v500
      %v502 = vadd.f32 %v501, 1.0
      %v503 = vrcp.pop %v502
      %v504 = vmul.f32 1.0, %v503
      %v505 = vlaneseq
      %v506 = vshrl.u32 %v505, 7
      %v507 = vsub.s32 0, %v506
      %v508 = vrot.slane %v504, %v507
      %510 = vbcast.lane.b32.xlu0 %v508, 256
      %v511 = vpop.permute.xlu0 %510
      %s513 = sor.u32 256, 8
      %514 = vbcast.lane.b32.xlu0 %v508, %s513
      %v515 = vpop.permute.xlu0 %514
      %s517 = sor.u32 256, 16
      %518 = vbcast.lane.b32.xlu0 %v508, %s517
      %v519 = vpop.permute.xlu0 %518
      %s521 = sor.u32 256, 24
      %522 = vbcast.lane.b32.xlu0 %v508, %s521
      %v523 = vpop.permute.xlu0 %522
      %s525 = sor.u32 256, 32
      %526 = vbcast.lane.b32.xlu0 %v508, %s525
      %v527 = vpop.permute.xlu0 %526
      %s529 = sor.u32 256, 40
      %530 = vbcast.lane.b32.xlu0 %v508, %s529
      %v531 = vpop.permute.xlu0 %530
      %s533 = sor.u32 256, 48
      %534 = vbcast.lane.b32.xlu0 %v508, %s533
      %v535 = vpop.permute.xlu0 %534
      %s537 = sor.u32 256, 56
      %538 = vbcast.lane.b32.xlu0 %v508, %s537
      %v539 = vpop.permute.xlu0 %538
      %v540 = vmul.f32 %v225, %v511
      %v541 = vmul.f32 %v226, %v511
      %v542 = vmul.f32 %v227, %v515
      %v543 = vmul.f32 %v228, %v515
      %v544 = vmul.f32 %v229, %v519
      %v545 = vmul.f32 %v230, %v519
      %v546 = vmul.f32 %v231, %v523
      %v547 = vmul.f32 %v232, %v523
      %v548 = vmul.f32 %v233, %v527
      %v549 = vmul.f32 %v234, %v527
      %v550 = vmul.f32 %v235, %v531
      %v551 = vmul.f32 %v236, %v531
      %v552 = vmul.f32 %v237, %v535
      %v553 = vmul.f32 %v238, %v535
      %v554 = vmul.f32 %v239, %v539
      %v555 = vmul.f32 %v240, %v539
      %556 = vst [vmem:[%s224] sm:$0xff] %v540
      %557 = vst [vmem:[%s224 + $0x8] sm:$0xff] %v541
      %558 = vst [vmem:[%s224 + $0x10] sm:$0xff] %v542
      %559 = vst [vmem:[%s224 + $0x18] sm:$0xff] %v543
      %560 = vst [vmem:[%s224 + $0x20] sm:$0xff] %v544
      %561 = vst [vmem:[%s224 + $0x28] sm:$0xff] %v545
      %562 = vst [vmem:[%s224 + $0x30] sm:$0xff] %v546
      %563 = vst [vmem:[%s224 + $0x38] sm:$0xff] %v547
      %564 = vst [vmem:[%s224 + $0x40] sm:$0xff] %v548
      %565 = vst [vmem:[%s224 + $0x48] sm:$0xff] %v549
      %566 = vst [vmem:[%s224 + $0x50] sm:$0xff] %v550
      %567 = vst [vmem:[%s224 + $0x58] sm:$0xff] %v551
      %568 = vst [vmem:[%s224 + $0x60] sm:$0xff] %v552
      %569 = vst [vmem:[%s224 + $0x68] sm:$0xff] %v553
      %570 = vst [vmem:[%s224 + $0x70] sm:$0xff] %v554
      %571 = vst [vmem:[%s224 + $0x78] sm:$0xff] %v555
      %p572 = scmp.lt.s32.totalorder %s16, 1
      %s573 = scalar_select %p572, %s16, 1
      %s574 = smul.addr %s573, 16
      %s575 = smul.addr %s574, 8
      %s576 = scalar_lea.vmem %s5, %s575
      // Predicated region
      $region41: #{ca_layer.1} parent=39 // pred_check
        %p577 = pneg %p144
      $region42: #{ca_layer.1} parent=39 // pred_check_branch
        %579 = sbr.rel (%p577) target = $region44
      $region43: #{ca_layer.1} parent=39 // pred_region
        _
      $region44: #{ca_layer.1} parent=39 // pred_fallthru
        _
    $region40: #{ca_layer.1} parent=5 // pred_fallthru
      _
    %p580 = scmp.le.s32.totalorder 2, %s11
    // Predicated region
    $region45: #{ca_layer.1} parent=5 // pred_check
      %p581 = pneg %p580
    $region46: #{ca_layer.1} parent=5 // pred_check_branch
      %583 = sbr.rel (%p581) target = $region48
    $region47: #{ca_layer.1} parent=5 // pred_region
      %s584 = ssub.s32 %s11, 2
      // Predicated region
      $region49: #{ca_layer.1} parent=47 // pred_check
        %p585 = pneg %p150
      $region50: #{ca_layer.1} parent=47 // pred_check_branch
        %587 = sbr.rel (%p585) target = $region52
      $region51: #{ca_layer.1} parent=47 // pred_region
        %p588 = scmp.lt.s32.totalorder %s17, 1
        %s589 = scalar_select %p588, %s17, 1
        %s590 = smul.addr %s589, 16
        %s591 = smul.addr %s590, 8
        %s592 = scalar_lea.vmem %s5, %s591
      $region52: #{ca_layer.1} parent=47 // pred_fallthru
        _
    $region48: #{ca_layer.1} parent=5 // pred_fallthru
      _
  $region6: #{ca_layer.1} parent=0 // loop_footer
    %s15 = sadd.s32 1, %s11
  $region7: #{ca_layer.1} parent=0 // loop_footer_branch
    %10 = sbr.rel target = $region3
  $region8: #{ca_layer.1} parent=0 // loop_exit
    _

</llo_original>
